<compile_context>
chip_gen: v7x
topology: tpu7x:2x2x1
jax: 0.10.0
libtpu: 0.0.40
codegen_flags: <defaults>
</compile_context>

<pallas_src>
import functools

import jax
import jax.numpy as jnp
from jax import lax
from jax.experimental import pallas as pl
from jax.experimental.pallas import tpu as pltpu


# dot_general dimension numbers for A[M,K] . B[N,K] -> [M,N] (transposed RHS,
# the natively supported MXU "NT" form, as used by splash attention).
_NT_DIMS = (((1,), (1,)), ((), ()))


def _double_gpu_net_kernel(x_ref, w1_ref, w2_ref, w3_ref, ot_ref):
    # x_ref : (TB, 2)   batch-major input block (natural (B,2) HBM layout)
    # w1_ref: (10, 2), w2_ref: (50, 10), w3_ref: (4, 50)  (PyTorch (out,in))
    # ot_ref: (4, TB)   feature-major, lane-dense output block
    x = x_ref[...]

    # fc1 + ReLU: contract in_features of both operands -> h1 is already
    # feature-major (10, TB); no transpose of x anywhere.
    h1 = lax.dot_general(
        w1_ref[...], x, _NT_DIMS, preferred_element_type=jnp.float32
    )
    h1 = jnp.maximum(h1, 0.0)

    # fc2 + ReLU : (50, 10) @ (10, TB) -> (50, TB)
    h2 = jnp.maximum(
        jnp.dot(w2_ref[...], h1, preferred_element_type=jnp.float32), 0.0
    )

    # fc3 : (4, 50) @ (50, TB) -> (4, TB)
    logits = jnp.dot(w3_ref[...], h2, preferred_element_type=jnp.float32)

    # Numerically stable softmax over the 4 classes (sublane axis); exact
    # reciprocal + multiply instead of a divide.
    m = jnp.max(logits, axis=0, keepdims=True)      # (1, TB)
    e = jnp.exp(logits - m)                         # (4, TB)
    s = jnp.sum(e, axis=0, keepdims=True)           # (1, TB)
    ot_ref[...] = (e * pl.reciprocal(s)).astype(ot_ref.dtype)


def _round_up(n, m):
    return -(-n // m) * m


def _pick_batch_tile(B, max_tile):
    """Batch tile (= lane width of the compute). Always a multiple of 128."""
    largest = (B // 128) * 128                       # biggest tile <= the array
    # ~ceil(B/2) rounded up to 512: >=2 grid steps for big batches (feeds both
    # v7x TensorCores) while keeping tiles in the 512..max_tile sweet spot.
    want = min(max_tile, _round_up(-(-B // 2), 512))
    return max(128, min(want, largest))


@functools.partial(jax.jit, static_argnames=("max_tile", "lane_major_output"))
def double_gpu_net(x, w1, w2, w3, *, max_tile=512, lane_major_output=False):
    """x: (B, 2) f32; w1: (10, 2); w2: (50, 10); w3: (4, 50) (PyTorch layout).

    max_tile: cap on the batch tile (512 is safe on v5e; sweep 512/1024 on
    v6e/v7x). lane_major_output=True returns the (4, B) lane-major slab so a
    downstream consumer can fuse the final transpose.
    """
    B0 = x.shape[0]
    x_in = x
    if B0 < 128:
        # Tiny batches: pad up to one full 128-lane tile; padded rows are
        # computed (harmlessly, softmax of zeros) and sliced off below.
        x_in = jnp.pad(x, ((0, 128 - B0), (0, 0)))
    B = x_in.shape[0]

    TB = _pick_batch_tile(B, max_tile)
    grid = (pl.cdiv(B, TB),)   # partial last tile is masked by Pallas

    out_t = pl.pallas_call(
        _double_gpu_net_kernel,
        out_shape=jax.ShapeDtypeStruct((4, B), x.dtype),
        grid=grid,
        in_specs=[
            pl.BlockSpec((TB, 2), lambda i: (i, 0)),    # x tile, walks the batch
            pl.BlockSpec((10, 2), lambda i: (0, 0)),    # weights stay resident
            pl.BlockSpec((50, 10), lambda i: (0, 0)),
            pl.BlockSpec((4, 50), lambda i: (0, 0)),
        ],
        out_specs=pl.BlockSpec((4, TB), lambda i: (0, i)),  # lane-dense store
        compiler_params=pltpu.CompilerParams(
            dimension_semantics=("parallel",),          # megacore on v7x
        ),
    )(x_in, w1, w2, w3)

    out_t = out_t[:, :B0]
    if lane_major_output:
        return out_t              # (4, B0): let the consumer fuse the transpose
    return out_t.T                # (B0, 4): matches F.softmax(fc3(...), dim=1)


def _reference(x, w1, w2, w3):
    h1 = jnp.maximum(x @ w1.T, 0.0)
    h2 = jnp.maximum(h1 @ w2.T, 0.0)
    logits = h2 @ w3.T
    return jax.nn.softmax(logits, axis=1)


if __name__ == "__main__":
    key = jax.random.PRNGKey(0)
    kx, k1, k2, k3 = jax.random.split(key, 4)

    # PyTorch nn.Linear(bias=False) default init: U(-1/sqrt(fan_in), +1/sqrt(fan_in)).
    def linear_init(k, out_f, in_f):
        bound = 1.0 / (in_f ** 0.5)
        return jax.random.uniform(k, (out_f, in_f), jnp.float32, -bound, bound)

    w1 = linear_init(k1, 10, 2)    # fc1.weight
    w2 = linear_init(k2, 50, 10)   # fc2.weight
    w3 = linear_init(k3, 4, 50)    # fc3.weight
    # no_grad_param = [2, 2] (int64) is unused in forward; intentionally omitted.

    x_all = jax.random.normal(kx, (1024, 2), dtype=jnp.float32)

    # B=2    : module-natural tiny batch (pads to one 128-lane tile)
    # B=777  : non-multiple-of-128 batch -> cdiv grid with a masked partial tile
    # B=1024 : two 512-lane tiles -> pipelined multi-step path, even step count
    for B in (2, 777, 1024):
        xb = x_all[:B]
        out = jax.block_until_ready(double_gpu_net(xb, w1, w2, w3))
        ref = _reference(xb, w1, w2, w3)
        assert out.shape == (B, 4)
        assert jnp.allclose(out, ref, atol=1e-5, rtol=1e-5), f"mismatch at B={B}"

    print("KERNEL_OK")
</pallas_src>

<mosaic_0001>
module attributes {stable_mosaic.version = 11 : i64} {
  func.func @_double_gpu_net_kernel(%arg0: i32, %arg1: memref<128x2xf32, #tpu.memory_space<vmem>>, %arg2: memref<10x2xf32, #tpu.memory_space<vmem>>, %arg3: memref<50x10xf32, #tpu.memory_space<vmem>>, %arg4: memref<4x50xf32, #tpu.memory_space<vmem>>, %arg5: memref<4x128xf32, #tpu.memory_space<vmem>>) attributes {dimension_semantics = [#tpu.dimension_semantics<parallel>], iteration_bounds = array<i64: 1>, scalar_prefetch = 0 : i64, scratch_operands = 0 : i64, tpu.core_type = #tpu.core_type<tc>, window_params = [{transform_indices = @transform_0, window_bounds = array<i64: 128, 2>}, {pipeline_mode = #tpu.pipeline_mode<synchronous>, transform_indices = @transform_1, window_bounds = array<i64: 10, 2>}, {pipeline_mode = #tpu.pipeline_mode<synchronous>, transform_indices = @transform_2, window_bounds = array<i64: 50, 10>}, {pipeline_mode = #tpu.pipeline_mode<synchronous>, transform_indices = @transform_3, window_bounds = array<i64: 4, 50>}, {transform_indices = @transform_4, window_bounds = array<i64: 4, 128>}]} {
    %c0 = arith.constant 0 : index
    %c0_0 = arith.constant 0 : index
    %0 = vector.load %arg1[%c0, %c0_0] : memref<128x2xf32, #tpu.memory_space<vmem>>, vector<128x2xf32>
    %c0_1 = arith.constant 0 : index
    %c0_2 = arith.constant 0 : index
    %1 = vector.load %arg2[%c0_1, %c0_2] : memref<10x2xf32, #tpu.memory_space<vmem>>, vector<10x2xf32>
    %cst = arith.constant dense<0.000000e+00> : vector<10x128xf32>
    %2 = tpu.matmul %1, %0, %cst {dimension_numbers = #tpu.dot_dimension_numbers<[1], [1], [0], [0], [0, 0, 1, 0], [], []>} : vector<10x2xf32>, vector<128x2xf32>, vector<10x128xf32> -> vector<10x128xf32>
    %cst_3 = arith.constant 0.000000e+00 : f32
    %3 = vector.broadcast %cst_3 : f32 to vector<10x128xf32>
    %4 = arith.maximumf %2, %3 : vector<10x128xf32>
    %c0_4 = arith.constant 0 : index
    %c0_5 = arith.constant 0 : index
    %5 = vector.load %arg3[%c0_4, %c0_5] : memref<50x10xf32, #tpu.memory_space<vmem>>, vector<50x10xf32>
    %cst_6 = arith.constant dense<0.000000e+00> : vector<50x128xf32>
    %6 = tpu.matmul %5, %4, %cst_6 {dimension_numbers = #tpu.dot_dimension_numbers<[1], [0], [0], [1], [0, 0, 1, 1], [], []>} : vector<50x10xf32>, vector<10x128xf32>, vector<50x128xf32> -> vector<50x128xf32>
    %cst_7 = arith.constant 0.000000e+00 : f32
    %7 = vector.broadcast %cst_7 : f32 to vector<50x128xf32>
    %8 = arith.maximumf %6, %7 : vector<50x128xf32>
    %c0_8 = arith.constant 0 : index
    %c0_9 = arith.constant 0 : index
    %9 = vector.load %arg4[%c0_8, %c0_9] : memref<4x50xf32, #tpu.memory_space<vmem>>, vector<4x50xf32>
    %cst_10 = arith.constant dense<0.000000e+00> : vector<4x128xf32>
    %10 = tpu.matmul %9, %8, %cst_10 {dimension_numbers = #tpu.dot_dimension_numbers<[1], [0], [0], [1], [0, 0, 1, 1], [], []>} : vector<4x50xf32>, vector<50x128xf32>, vector<4x128xf32> -> vector<4x128xf32>
    %cst_11 = arith.constant dense<0xFF800000> : vector<128xf32>
    %11 = vector.multi_reduction <maximumf>, %10, %cst_11 [0] : vector<4x128xf32> to vector<128xf32>
    %12 = vector.shape_cast %11 : vector<128xf32> to vector<1x128xf32>
    %13 = vector.broadcast %12 : vector<1x128xf32> to vector<4x128xf32>
    %14 = arith.subf %10, %13 : vector<4x128xf32>
    %15 = math.exp %14 : vector<4x128xf32>
    %cst_12 = arith.constant dense<0.000000e+00> : vector<128xf32>
    %16 = vector.multi_reduction <add>, %15, %cst_12 [0] : vector<4x128xf32> to vector<128xf32>
    %17 = vector.shape_cast %16 : vector<128xf32> to vector<1x128xf32>
    %18 = tpu.reciprocal %17 : vector<1x128xf32> -> vector<1x128xf32>
    %19 = vector.broadcast %18 : vector<1x128xf32> to vector<4x128xf32>
    %20 = arith.mulf %15, %19 : vector<4x128xf32>
    %c0_13 = arith.constant 0 : index
    %c0_14 = arith.constant 0 : index
    %21 = vector.load %arg5[%c0_13, %c0_14] : memref<4x128xf32, #tpu.memory_space<vmem>>, vector<4x128xf32>
    tpu.vector_store %arg5[%c0_13, %c0_14], %20 {strides = array<i32>} : memref<4x128xf32, #tpu.memory_space<vmem>>, vector<4x128xf32>,
    return
  }
  func.func @transform_0(%arg0: i32) -> (i32, i32) {
    %c0_i32 = arith.constant 0 : i32
    %c0_i32_0 = arith.constant 0 : i32
    return %arg0, %c0_i32 : i32, i32
  }
  func.func @transform_1(%arg0: i32) -> (i32, i32) {
    %c0_i32 = arith.constant 0 : i32
    %c0_i32_0 = arith.constant 0 : i32
    %c0_i32_1 = arith.constant 0 : i32
    return %c0_i32, %c0_i32_0 : i32, i32
  }
  func.func @transform_2(%arg0: i32) -> (i32, i32) {
    %c0_i32 = arith.constant 0 : i32
    %c0_i32_0 = arith.constant 0 : i32
    %c0_i32_1 = arith.constant 0 : i32
    return %c0_i32, %c0_i32_0 : i32, i32
  }
  func.func @transform_3(%arg0: i32) -> (i32, i32) {
    %c0_i32 = arith.constant 0 : i32
    %c0_i32_0 = arith.constant 0 : i32
    %c0_i32_1 = arith.constant 0 : i32
    return %c0_i32, %c0_i32_0 : i32, i32
  }
  func.func @transform_4(%arg0: i32) -> (i32, i32) {
    %c0_i32 = arith.constant 0 : i32
    %c0_i32_0 = arith.constant 0 : i32
    return %c0_i32, %arg0 : i32, i32
  }
}

</mosaic_0001>

<llo_original>
// kernel: double_gpu_net.1
$region0: #{double_gpu_net.1}
  #allocation0 [shape = 'u32[]', space=smem, size = 0x4, offset = 0x4, fixed_abs, tag = 'smem constant byte address 0x4 - core index']
  #allocation1 [shape = 'u32[144,128]{1,0:T(1,128)}', space=vmem, size = 0x12000, scoped, tag = 'internal scratch']
  %s0 = inlined_call_operand.vmem [shape: f32[128,2], index: 0, kind: input, shape index: {}]
  %s1 = inlined_call_operand.vmem [shape: f32[10,2], index: 1, kind: input, shape index: {}]
  %s2 = inlined_call_operand.vmem [shape: f32[50,10], index: 2, kind: input, shape index: {}]
  %s3 = inlined_call_operand.vmem [shape: f32[4,50], index: 3, kind: input, shape index: {}]
  %s4 = inlined_call_operand.vmem [shape: f32[4,128], index: 4, kind: output, shape index: {}]
  %s5 = sld [smem:[#allocation0]]
  $region26: #{double_gpu_net.1} parent=0
    _
  %s7 = ssub.s32 1, %s5
  %s8 = scalar_select 0, %s7, %s5
  // Predicated region
  $region2: #{double_gpu_net.1} parent=0 // pred_check
    _
  $region3: #{double_gpu_net.1} parent=0 // pred_check_branch
    %10 = sbr.rel (0) target = $region5
  $region4: #{double_gpu_net.1} parent=0 // pred_region
    _
  $region5: #{double_gpu_net.1} parent=0 // pred_fallthru
    _
  // Predicated region
  $region6: #{double_gpu_net.1} parent=0 // pred_check
    _
  $region7: #{double_gpu_net.1} parent=0 // pred_check_branch
    %12 = sbr.rel (0) target = $region9
  $region8: #{double_gpu_net.1} parent=0 // pred_region
    _
  $region9: #{double_gpu_net.1} parent=0 // pred_fallthru
    _
  // Predicated region
  $region10: #{double_gpu_net.1} parent=0 // pred_check
    _
  $region11: #{double_gpu_net.1} parent=0 // pred_check_branch
    %14 = sbr.rel (0) target = $region13
  $region12: #{double_gpu_net.1} parent=0 // pred_region
    _
  $region13: #{double_gpu_net.1} parent=0 // pred_fallthru
    _
  // Predicated region
  $region14: #{double_gpu_net.1} parent=0 // pred_check
    _
  $region15: #{double_gpu_net.1} parent=0 // pred_check_branch
    %16 = sbr.rel (0) target = $region17
  $region16: #{double_gpu_net.1} parent=0 // pred_region
    _
  $region17: #{double_gpu_net.1} parent=0 // pred_fallthru
    _
  %v17 = vld [vmem:[%s0] sm:$0xff]
  %v18 = vld [vmem:[%s0 + $0x8] sm:$0xff]
  %v19 = vld [vmem:[%s0 + $0x10] sm:$0xff]
  %v20 = vld [vmem:[%s0 + $0x18] sm:$0xff]
  %v21 = vld [vmem:[%s0 + $0x20] sm:$0xff]
  %v22 = vld [vmem:[%s0 + $0x28] sm:$0xff]
  %v23 = vld [vmem:[%s0 + $0x30] sm:$0xff]
  %v24 = vld [vmem:[%s0 + $0x38] sm:$0xff]
  %v25 = vld [vmem:[%s0 + $0x40] sm:$0xff]
  %v26 = vld [vmem:[%s0 + $0x48] sm:$0xff]
  %v27 = vld [vmem:[%s0 + $0x50] sm:$0xff]
  %v28 = vld [vmem:[%s0 + $0x58] sm:$0xff]
  %v29 = vld [vmem:[%s0 + $0x60] sm:$0xff]
  %v30 = vld [vmem:[%s0 + $0x68] sm:$0xff]
  %v31 = vld [vmem:[%s0 + $0x70] sm:$0xff]
  %v32 = vld [vmem:[%s0 + $0x78] sm:$0xff]
  %v33 = vld [vmem:[%s1] sm:$0xff]
  %v34 = vld [vmem:[%s1 + $0x8] sm:$0x3]
  %vm35 = vcmask 15360
  %v37 = vsel %vm35, %v33, 0
  %v40 = vsel %vm35, %v34, 0
  %v43 = vsel %vm35, %v17, 0
  %v46 = vsel %vm35, %v18, 0
  %v49 = vsel %vm35, %v19, 0
  %v52 = vsel %vm35, %v20, 0
  %v55 = vsel %vm35, %v21, 0
  %v58 = vsel %vm35, %v22, 0
  %v61 = vsel %vm35, %v23, 0
  %v64 = vsel %vm35, %v24, 0
  %v67 = vsel %vm35, %v25, 0
  %v70 = vsel %vm35, %v26, 0
  %v73 = vsel %vm35, %v27, 0
  %v76 = vsel %vm35, %v28, 0
  %v79 = vsel %vm35, %v29, 0
  %v82 = vsel %vm35, %v30, 0
  %v85 = vsel %vm35, %v31, 0
  %v88 = vsel %vm35, %v32, 0
  %90 = vmatprep.subr.mxu0 0.0
  %91 = vmatpush1.xpose.msra.mxu0 %v43
  %92 = vmatprep.subr.mxu0 0.0
  %93 = vmatpush1.xpose.msra.mxu0 %v46
  %94 = vmatprep.subr.mxu0 0.0
  %95 = vmatpush1.xpose.msra.mxu0 %v49
  %96 = vmatprep.subr.mxu0 0.0
  %97 = vmatpush1.xpose.msra.mxu0 %v52
  %98 = vmatprep.subr.mxu0 0.0
  %99 = vmatpush1.xpose.msra.mxu0 %v55
  %100 = vmatprep.subr.mxu0 0.0
  %101 = vmatpush1.xpose.msra.mxu0 %v58
  %102 = vmatprep.subr.mxu0 0.0
  %103 = vmatpush1.xpose.msra.mxu0 %v61
  %104 = vmatprep.subr.mxu0 0.0
  %105 = vmatpush1.xpose.msra.mxu0 %v64
  %106 = vmatprep.subr.mxu0 0.0
  %107 = vmatpush1.xpose.msra.mxu0 %v67
  %108 = vmatprep.subr.mxu0 0.0
  %109 = vmatpush1.xpose.msra.mxu0 %v70
  %110 = vmatprep.subr.mxu0 0.0
  %111 = vmatpush1.xpose.msra.mxu0 %v73
  %112 = vmatprep.subr.mxu0 0.0
  %113 = vmatpush1.xpose.msra.mxu0 %v76
  %114 = vmatprep.subr.mxu0 0.0
  %115 = vmatpush1.xpose.msra.mxu0 %v79
  %116 = vmatprep.subr.mxu0 0.0
  %117 = vmatpush1.xpose.msra.mxu0 %v82
  %118 = vmatprep.subr.mxu0 0.0
  %119 = vmatpush1.xpose.msra.mxu0 %v85
  %120 = vmatprep.subr.mxu0 0.0
  %121 = vmatpush1.xpose.msra.mxu0 %v88
  %122 = vmatprep.subr.mxu0 0.0
  %123 = vmatpush1.xpose.msra.mxu0 0.0
  %124 = vmatprep.subr.mxu0 0.0
  %125 = vmatpush1.xpose.msra.mxu0 0.0
  %126 = vmatprep.subr.mxu0 0.0
  %127 = vmatpush1.xpose.msra.mxu0 0.0
  %128 = vmatprep.subr.mxu0 0.0
  %129 = vmatpush1.xpose.msra.mxu0 0.0
  %130 = vmatprep.subr.mxu0 0.0
  %131 = vmatpush1.xpose.msra.mxu0 0.0
  %132 = vmatprep.subr.mxu0 0.0
  %133 = vmatpush1.xpose.msra.mxu0 0.0
  %134 = vmatprep.subr.mxu0 0.0
  %135 = vmatpush1.xpose.msra.mxu0 0.0
  %136 = vmatprep.subr.mxu0 0.0
  %137 = vmatpush1.xpose.msra.mxu0 0.0
  %138 = vmatprep.subr.mxu0 0.0
  %139 = vmatpush1.xpose.msra.mxu0 0.0
  %140 = vmatprep.subr.mxu0 0.0
  %141 = vmatpush1.xpose.msra.mxu0 0.0
  %142 = vmatprep.subr.mxu0 0.0
  %143 = vmatpush1.xpose.msra.mxu0 0.0
  %144 = vmatprep.subr.mxu0 0.0
  %145 = vmatpush1.xpose.msra.mxu0 0.0
  %146 = vmatprep.subr.mxu0 0.0
  %147 = vmatpush1.xpose.msra.mxu0 0.0
  %148 = vmatprep.subr.mxu0 0.0
  %149 = vmatpush1.xpose.msra.mxu0 0.0
  %150 = vmatprep.subr.mxu0 0.0
  %151 = vmatpush1.xpose.msra.mxu0 0.0
  %152 = vmatprep.subr.mxu0 0.0
  %153 = vmatpush1.xpose.msra.mxu0 0.0
  %154 = vmatprep.mubr.f32.mxu0 0.0
  %155 = vmatmul.mubr.f32.gmra.mrb[0].mxu0 %v37
  %v156 = vpop.f32.mrb[0].mxu0
  %v157 = vadd.f32 0.0, %v156
  %v158 = vpop.f32.mrb[0].mxu0
  %159 = vmatprep.mubr.f32.mxu0 0.0
  %160 = vmatmul.mubr.f32.gmra.mrb[0].mxu0 %v40
  %v161 = vpop.f32.mrb[0].mxu0
  %v162 = vadd.f32 0.0, %v161
  %v163 = vpop.f32.mrb[0].mxu0
  %164 = vdwg.mxu0
  %v165 = vmax.f32 %v157, 0.0
  %v166 = vmax.f32 %v162, 0.0
  %v167 = vld [vmem:[%s2] sm:$0xff]
  %v168 = vld [vmem:[%s2 + $0x8] sm:$0xff]
  %v169 = vld [vmem:[%s2 + $0x10] sm:$0xff]
  %v170 = vld [vmem:[%s2 + $0x18] sm:$0xff]
  %v171 = vld [vmem:[%s2 + $0x20] sm:$0xff]
  %v172 = vld [vmem:[%s2 + $0x28] sm:$0xff]
  %v173 = vld [vmem:[%s2 + $0x30] sm:$0x3]
  %vm174 = vcmask 80896
  %v176 = vsel %vm174, %v167, 0
  %v179 = vsel %vm174, %v168, 0
  %v182 = vsel %vm174, %v169, 0
  %v185 = vsel %vm174, %v170, 0
  %v188 = vsel %vm174, %v171, 0
  %v191 = vsel %vm174, %v172, 0
  %v194 = vsel %vm174, %v173, 0
  %vm196 = vcmask 1041408
  %v198 = vsel %vm196, %v166, 0
  %200 = vmatprep.subr.mxu0 0.0
  %201 = vmatpush1.msra.mxu0 %v165
  %202 = vmatprep.subr.mxu0 0.0
  %203 = vmatpush1.msra.mxu0 %v198
  %204 = vmatprep.subr.mxu0 0.0
  %205 = vmatpush1.msra.mxu0 0.0
  %206 = vmatprep.subr.mxu0 0.0
  %207 = vmatpush1.msra.mxu0 0.0
  %208 = vmatprep.subr.mxu0 0.0
  %209 = vmatpush1.msra.mxu0 0.0
  %210 = vmatprep.subr.mxu0 0.0
  %211 = vmatpush1.msra.mxu0 0.0
  %212 = vmatprep.subr.mxu0 0.0
  %213 = vmatpush1.msra.mxu0 0.0
  %214 = vmatprep.subr.mxu0 0.0
  %215 = vmatpush1.msra.mxu0 0.0
  %216 = vmatprep.subr.mxu0 0.0
  %217 = vmatpush1.msra.mxu0 0.0
  %218 = vmatprep.subr.mxu0 0.0
  %219 = vmatpush1.msra.mxu0 0.0
  %220 = vmatprep.subr.mxu0 0.0
  %221 = vmatpush1.msra.mxu0 0.0
  %222 = vmatprep.subr.mxu0 0.0
  %223 = vmatpush1.msra.mxu0 0.0
  %224 = vmatprep.subr.mxu0 0.0
  %225 = vmatpush1.msra.mxu0 0.0
  %226 = vmatprep.subr.mxu0 0.0
  %227 = vmatpush1.msra.mxu0 0.0
  %228 = vmatprep.subr.mxu0 0.0
  %229 = vmatpush1.msra.mxu0 0.0
  %230 = vmatprep.subr.mxu0 0.0
  %231 = vmatpush1.msra.mxu0 0.0
  %232 = vmatprep.subr.mxu0 0.0
  %233 = vmatpush1.msra.mxu0 0.0
  %234 = vmatprep.subr.mxu0 0.0
  %235 = vmatpush1.msra.mxu0 0.0
  %236 = vmatprep.subr.mxu0 0.0
  %237 = vmatpush1.msra.mxu0 0.0
  %238 = vmatprep.subr.mxu0 0.0
  %239 = vmatpush1.msra.mxu0 0.0
  %240 = vmatprep.subr.mxu0 0.0
  %241 = vmatpush1.msra.mxu0 0.0
  %242 = vmatprep.subr.mxu0 0.0
  %243 = vmatpush1.msra.mxu0 0.0
  %244 = vmatprep.subr.mxu0 0.0
  %245 = vmatpush1.msra.mxu0 0.0
  %246 = vmatprep.subr.mxu0 0.0
  %247 = vmatpush1.msra.mxu0 0.0
  %248 = vmatprep.subr.mxu0 0.0
  %249 = vmatpush1.msra.mxu0 0.0
  %250 = vmatprep.subr.mxu0 0.0
  %251 = vmatpush1.msra.mxu0 0.0
  %252 = vmatprep.subr.mxu0 0.0
  %253 = vmatpush1.msra.mxu0 0.0
  %254 = vmatprep.subr.mxu0 0.0
  %255 = vmatpush1.msra.mxu0 0.0
  %256 = vmatprep.subr.mxu0 0.0
  %257 = vmatpush1.msra.mxu0 0.0
  %258 = vmatprep.subr.mxu0 0.0
  %259 = vmatpush1.msra.mxu0 0.0
  %260 = vmatprep.subr.mxu0 0.0
  %261 = vmatpush1.msra.mxu0 0.0
  %262 = vmatprep.subr.mxu0 0.0
  %263 = vmatpush1.msra.mxu0 0.0
  %264 = vmatprep.mubr.f32.mxu0 0.0
  %265 = vmatmul.mubr.f32.gmra.mrb[0].mxu0 %v176
  %v266 = vpop.f32.mrb[0].mxu0
  %v267 = vadd.f32 0.0, %v266
  %v268 = vpop.f32.mrb[0].mxu0
  %269 = vmatprep.mubr.f32.mxu0 0.0
  %270 = vmatmul.mubr.f32.gmra.mrb[0].mxu0 %v179
  %v271 = vpop.f32.mrb[0].mxu0
  %v272 = vadd.f32 0.0, %v271
  %v273 = vpop.f32.mrb[0].mxu0
  %274 = vmatprep.mubr.f32.mxu0 0.0
  %275 = vmatmul.mubr.f32.gmra.mrb[0].mxu0 %v182
  %v276 = vpop.f32.mrb[0].mxu0
  %v277 = vadd.f32 0.0, %v276
  %v278 = vpop.f32.mrb[0].mxu0
  %279 = vmatprep.mubr.f32.mxu0 0.0
  %280 = vmatmul.mubr.f32.gmra.mrb[0].mxu0 %v185
  %v281 = vpop.f32.mrb[0].mxu0
  %v282 = vadd.f32 0.0, %v281
  %v283 = vpop.f32.mrb[0].mxu0
  %284 = vmatprep.mubr.f32.mxu0 0.0
  %285 = vmatmul.mubr.f32.gmra.mrb[0].mxu0 %v188
  %v286 = vpop.f32.mrb[0].mxu0
  %v287 = vadd.f32 0.0, %v286
  %v288 = vpop.f32.mrb[0].mxu0
  %289 = vmatprep.mubr.f32.mxu0 0.0
  %290 = vmatmul.mubr.f32.gmra.mrb[0].mxu0 %v191
  %v291 = vpop.f32.mrb[0].mxu0
  %v292 = vadd.f32 0.0, %v291
  %v293 = vpop.f32.mrb[0].mxu0
  %294 = vmatprep.mubr.f32.mxu0 0.0
  %295 = vmatmul.mubr.f32.gmra.mrb[0].mxu0 %v194
  %v296 = vpop.f32.mrb[0].mxu0
  %v297 = vadd.f32 0.0, %v296
  %v298 = vpop.f32.mrb[0].mxu0
  %299 = vdwg.mxu0
  %v300 = vmax.f32 %v267, 0.0
  %v301 = vmax.f32 %v272, 0.0
  %v302 = vmax.f32 %v277, 0.0
  %v303 = vmax.f32 %v282, 0.0
  %v304 = vmax.f32 %v287, 0.0
  %v305 = vmax.f32 %v292, 0.0
  %v306 = vmax.f32 %v297, 0.0
  %v307 = vld [vmem:[%s3] sm:$0xf]
  %vm308 = vcmask 408576
  %v310 = vsel %vm308, %v307, 0
  %v313 = vsel %vm196, %v306, 0
  %315 = vmatprep.subr.mxu0 0.0
  %316 = vmatpush1.msra.mxu0 %v300
  %317 = vmatprep.subr.mxu0 0.0
  %318 = vmatpush1.msra.mxu0 %v301
  %319 = vmatprep.subr.mxu0 0.0
  %320 = vmatpush1.msra.mxu0 %v302
  %321 = vmatprep.subr.mxu0 0.0
  %322 = vmatpush1.msra.mxu0 %v303
  %323 = vmatprep.subr.mxu0 0.0
  %324 = vmatpush1.msra.mxu0 %v304
  %325 = vmatprep.subr.mxu0 0.0
  %326 = vmatpush1.msra.mxu0 %v305
  %327 = vmatprep.subr.mxu0 0.0
  %328 = vmatpush1.msra.mxu0 %v313
  %329 = vmatprep.subr.mxu0 0.0
  %330 = vmatpush1.msra.mxu0 0.0
  %331 = vmatprep.subr.mxu0 0.0
  %332 = vmatpush1.msra.mxu0 0.0
  %333 = vmatprep.subr.mxu0 0.0
  %334 = vmatpush1.msra.mxu0 0.0
  %335 = vmatprep.subr.mxu0 0.0
  %336 = vmatpush1.msra.mxu0 0.0
  %337 = vmatprep.subr.mxu0 0.0
  %338 = vmatpush1.msra.mxu0 0.0
  %339 = vmatprep.subr.mxu0 0.0
  %340 = vmatpush1.msra.mxu0 0.0
  %341 = vmatprep.subr.mxu0 0.0
  %342 = vmatpush1.msra.mxu0 0.0
  %343 = vmatprep.subr.mxu0 0.0
  %344 = vmatpush1.msra.mxu0 0.0
  %345 = vmatprep.subr.mxu0 0.0
  %346 = vmatpush1.msra.mxu0 0.0
  %347 = vmatprep.subr.mxu0 0.0
  %348 = vmatpush1.msra.mxu0 0.0
  %349 = vmatprep.subr.mxu0 0.0
  %350 = vmatpush1.msra.mxu0 0.0
  %351 = vmatprep.subr.mxu0 0.0
  %352 = vmatpush1.msra.mxu0 0.0
  %353 = vmatprep.subr.mxu0 0.0
  %354 = vmatpush1.msra.mxu0 0.0
  %355 = vmatprep.subr.mxu0 0.0
  %356 = vmatpush1.msra.mxu0 0.0
  %357 = vmatprep.subr.mxu0 0.0
  %358 = vmatpush1.msra.mxu0 0.0
  %359 = vmatprep.subr.mxu0 0.0
  %360 = vmatpush1.msra.mxu0 0.0
  %361 = vmatprep.subr.mxu0 0.0
  %362 = vmatpush1.msra.mxu0 0.0
  %363 = vmatprep.subr.mxu0 0.0
  %364 = vmatpush1.msra.mxu0 0.0
  %365 = vmatprep.subr.mxu0 0.0
  %366 = vmatpush1.msra.mxu0 0.0
  %367 = vmatprep.subr.mxu0 0.0
  %368 = vmatpush1.msra.mxu0 0.0
  %369 = vmatprep.subr.mxu0 0.0
  %370 = vmatpush1.msra.mxu0 0.0
  %371 = vmatprep.subr.mxu0 0.0
  %372 = vmatpush1.msra.mxu0 0.0
  %373 = vmatprep.subr.mxu0 0.0
  %374 = vmatpush1.msra.mxu0 0.0
  %375 = vmatprep.subr.mxu0 0.0
  %376 = vmatpush1.msra.mxu0 0.0
  %377 = vmatprep.subr.mxu0 0.0
  %378 = vmatpush1.msra.mxu0 0.0
  %379 = vmatprep.mubr.f32.mxu0 0.0
  %380 = vmatmul.mubr.f32.gmra.mrb[0].mxu0 %v310
  %v381 = vpop.f32.mrb[0].mxu0
  %v382 = vadd.f32 0.0, %v381
  %v383 = vpop.f32.mrb[0].mxu0
  %384 = vdwg.mxu0
  %vm385 = vcmask 1043456
  %v386 = vsel %vm385, %v382, -inf
  %v387 = vrot.slane %v386, 4
  %v388 = vmax.f32 %v386, %v387
  %v389 = vrot.slane %v388, 2
  %v390 = vmax.f32 %v388, %v389
  %v391 = vrot.slane %v390, 1
  %v392 = vmax.f32 %v390, %v391
  %v393 = vsub.f32 %v382, %v392
  %v394 = vmul.f32 %v393, 1.442695
  %v395 = vpow.pop %v394
  %v396 = vsel %vm385, %v395, 0.0
  %v397 = vrot.slane %v396, 4
  %v398 = vadd.f32 %v396, %v397
  %v399 = vrot.slane %v398, 2
  %v400 = vadd.f32 %v398, %v399
  %v401 = vrot.slane %v400, 1
  %v402 = vadd.f32 %v400, %v401
  %v403 = vrcp.pop %v402
  %v404 = vmul.f32 %v395, %v403
  %405 = vst [vmem:[%s4] sm:$0xf] %v404
  // Predicated region
  $region18: #{double_gpu_net.1} parent=0 // pred_check
    _
  $region19: #{double_gpu_net.1} parent=0 // pred_check_branch
    %407 = sbr.rel (0) target = $region21
  $region20: #{double_gpu_net.1} parent=0 // pred_region
    _
  $region21: #{double_gpu_net.1} parent=0 // pred_fallthru
    _
  // Predicated region
  $region22: #{double_gpu_net.1} parent=0 // pred_check
    _
  $region23: #{double_gpu_net.1} parent=0 // pred_check_branch
    %409 = sbr.rel (0) target = $region25
  $region24: #{double_gpu_net.1} parent=0 // pred_region
    _
  $region25: #{double_gpu_net.1} parent=0 // pred_fallthru
    _

</llo_original>
